<compile_context>
chip_gen: v5e
topology: v5e:2x2
jax: 0.10.0
libtpu: 0.0.40
codegen_flags: <defaults>
</compile_context>

<pallas_src>
import functools

import jax
import jax.numpy as jnp
from jax.experimental import pallas as pl
from jax.experimental.pallas import tpu as pltpu


# --------------------------- fused Pallas kernel ----------------------------

def _cross_embed_pallas(xs2d_list, w_taps_list, bias, metas, Ho, Wo):
    """All conv scales of the CrossEmbedLayer in one pallas_call.

    xs2d_list[i]:  (B, Ho+m_i-1, Wo+m_i-1, s*s*Cin)  space-to-depth'd input
    w_taps_list[i]: (m_i*m_i, s*s*Cin, dim_out)      tap-major weight matrices,
                                                     zero-padded into this
                                                     scale's channel block
    bias:          (dim_out,)                        concatenated conv biases
    Returns NHWC output (B, Ho, Wo, dim_out).
    """
    B = xs2d_list[0].shape[0]
    dim_out = bias.shape[-1]
    n_scales = len(xs2d_list)
    bias2 = bias.reshape(1, dim_out).astype(jnp.float32)

    def kernel(*refs):
        x_refs = refs[:n_scales]
        w_refs = refs[n_scales:2 * n_scales]
        bias_ref = refs[2 * n_scales]
        o_ref = refs[2 * n_scales + 1]

        # One f32 accumulator shared by every scale / tap -> a single
        # lane-dense (Ho*Wo, dim_out) store at the end.
        acc = jnp.zeros((Ho * Wo, dim_out), jnp.float32)
        for si, (m, _, _, c_s2d) in enumerate(metas):
            for di in range(m):
                for dj in range(m):
                    tap = x_refs[si][0, di:di + Ho, dj:dj + Wo, :]
                    tap = tap.reshape(Ho * Wo, c_s2d)
                    acc = acc + jnp.dot(tap, w_refs[si][di * m + dj],
                                        preferred_element_type=jnp.float32)
        out = acc + bias_ref[...]
        o_ref[0] = out.reshape(Ho, Wo, dim_out).astype(o_ref.dtype)

    in_specs = (
        [pl.BlockSpec((1, hs, ws, c), lambda b: (b, 0, 0, 0))
         for (_, hs, ws, c) in metas]
        + [pl.BlockSpec(w.shape, lambda b: (0, 0, 0)) for w in w_taps_list]
        + [pl.BlockSpec((1, dim_out), lambda b: (0, 0))]
    )

    return pl.pallas_call(
        kernel,
        out_shape=jax.ShapeDtypeStruct((B, Ho, Wo, dim_out), jnp.float32),
        grid=(B,),
        in_specs=in_specs,
        out_specs=pl.BlockSpec((1, Ho, Wo, dim_out), lambda b: (b, 0, 0, 0)),
        compiler_params=pltpu.CompilerParams(
            dimension_semantics=("parallel",),       # megacore split on v7x
            vmem_limit_bytes=32 * 1024 * 1024),      # portable to 64 MiB VMEM
    )(*xs2d_list, *w_taps_list, bias2)


# ------------------------------ forward pass --------------------------------

def cross_embed_forward(params, x, *, kernel_sizes, stride):
    """CrossEmbedLayer.forward. x: NCHW; returns NCHW (PyTorch parity)."""
    B, c_in, H, W = x.shape
    s = stride
    assert H % s == 0 and W % s == 0
    Ho, Wo = H // s, W // s

    # One layout transpose in, one out; everything else is channels-last.
    x_nhwc = jnp.transpose(x, (0, 2, 3, 1)).astype(jnp.float32)

    xs2d_list, metas = [], []
    for k in kernel_sizes:                       # already sorted (torch order)
        m = k // s
        p = (k - s) // 2
        xp = jnp.pad(x_nhwc, ((0, 0), (p, p), (p, p), (0, 0)))
        hs, ws = Ho + m - 1, Wo + m - 1
        # space-to-depth by the stride: conv(k, stride=s) -> conv(k//s, stride=1)
        xs2d = xp.reshape(B, hs, s, ws, s, c_in)
        xs2d = jnp.transpose(xs2d, (0, 1, 3, 2, 4, 5)).reshape(B, hs, ws, s * s * c_in)
        xs2d_list.append(xs2d)
        metas.append((m, hs, ws, s * s * c_in))

    out_nhwc = _cross_embed_pallas(xs2d_list, params["w_taps"], params["bias"],
                                   tuple(metas), Ho, Wo)
    return jnp.transpose(out_nhwc, (0, 3, 1, 2))


# ----------------------------- parameter init -------------------------------

def init_cross_embed(key, dim_in, dim_out, kernel_sizes, stride):
    kernel_sizes = sorted(kernel_sizes)
    num_scales = len(kernel_sizes)
    dim_scales = [int(dim_out / 2 ** i) for i in range(1, num_scales)]
    dim_scales = dim_scales + [dim_out - sum(dim_scales)]

    raw_w, raw_b, w_taps = [], [], []
    bias_full = jnp.zeros((dim_out,), jnp.float32)
    off = 0
    for k, dsc in zip(kernel_sizes, dim_scales):
        # TODO(synk): kernel sizes that are not multiples of the stride (or with
        # odd k-stride) would need a general per-tap strided-gather path; every
        # CrossFormer reference config satisfies these constraints.
        assert k % stride == 0 and (k - stride) % 2 == 0
        key, k1, k2 = jax.random.split(key, 3)
        w = 0.02 * jax.random.normal(k1, (dsc, dim_in, k, k), jnp.float32)
        b = 0.02 * jax.random.normal(k2, (dsc,), jnp.float32)
        raw_w.append(w)
        raw_b.append(b)

        m, s = k // stride, stride
        # (co, ci, kh, kw) -> tap-major (di, dj, pi, pj, ci, co) with kh = di*s+pi
        wr = w.reshape(dsc, dim_in, m, s, m, s).transpose(2, 4, 3, 5, 1, 0)
        wr = wr.reshape(m * m, s * s * dim_in, dsc)
        # zero-pad into the full dim_out channel range -> every in-kernel matmul
        # is N = dim_out (lane dense) and all scales share one accumulator.
        wp = jnp.zeros((m * m, s * s * dim_in, dim_out), jnp.float32)
        wp = wp.at[:, :, off:off + dsc].set(wr)
        w_taps.append(wp)
        bias_full = bias_full.at[off:off + dsc].set(b)
        off += dsc

    return {"w_taps": w_taps, "bias": bias_full,
            "raw": {"w": raw_w, "b": raw_b}}


# ---------------------- reference (for numerical check) ---------------------

def conv2d_reference(x, params, kernel_sizes, stride):
    outs = []
    for w, b, k in zip(params["raw"]["w"], params["raw"]["b"], sorted(kernel_sizes)):
        p = (k - stride) // 2
        o = jax.lax.conv_general_dilated(
            x, w, window_strides=(stride, stride), padding=((p, p), (p, p)),
            dimension_numbers=("NCHW", "OIHW", "NCHW"),
            precision=jax.lax.Precision.HIGHEST)
        outs.append(o + b.reshape(1, -1, 1, 1))
    return jnp.concatenate(outs, axis=1)


# ---------------------------------- main -------------------------------------

if __name__ == "__main__":
    key = jax.random.PRNGKey(0)
    pkey, xkey = jax.random.split(key)

    dim_in, dim_out = 4, 128           # dim_out = 128 -> lane-dense output
    kernel_sizes, stride = (2, 4), 2   # CrossFormer-style multi-scale embed
    B, H, W = 2, 16, 16

    params = init_cross_embed(pkey, dim_in, dim_out, kernel_sizes, stride)
    x = jax.random.normal(xkey, (B, dim_in, H, W), dtype=jnp.float32)

    fwd = jax.jit(functools.partial(cross_embed_forward,
                                    kernel_sizes=tuple(sorted(kernel_sizes)),
                                    stride=stride))
    out = jax.block_until_ready(fwd(params, x))
    assert out.shape == (B, dim_out, H // stride, W // stride)

    ref = conv2d_reference(x, params, kernel_sizes, stride)
    max_err = float(jnp.max(jnp.abs(out - ref)))
    assert max_err < 5e-3, f"mismatch vs conv reference: {max_err}"
    print("KERNEL_OK")
</pallas_src>

<mosaic_0001>
module attributes {stable_mosaic.version = 11 : i64} {
  func.func @kernel(%arg0: i32, %arg1: memref<1x8x8x16xf32, #tpu.memory_space<vmem>>, %arg2: memref<1x9x9x16xf32, #tpu.memory_space<vmem>>, %arg3: memref<1x16x128xf32, #tpu.memory_space<vmem>>, %arg4: memref<4x16x128xf32, #tpu.memory_space<vmem>>, %arg5: memref<1x128xf32, #tpu.memory_space<vmem>>, %arg6: memref<1x8x8x128xf32, #tpu.memory_space<vmem>>) attributes {dimension_semantics = [#tpu.dimension_semantics<parallel>], iteration_bounds = array<i64: 2>, scalar_prefetch = 0 : i64, scratch_operands = 0 : i64, tpu.core_type = #tpu.core_type<tc>, window_params = [{transform_indices = @transform_0, window_bounds = array<i64: 1, 8, 8, 16>}, {transform_indices = @transform_1, window_bounds = array<i64: 1, 9, 9, 16>}, {pipeline_mode = #tpu.pipeline_mode<synchronous>, transform_indices = @transform_2, window_bounds = array<i64: 1, 16, 128>}, {pipeline_mode = #tpu.pipeline_mode<synchronous>, transform_indices = @transform_3, window_bounds = array<i64: 4, 16, 128>}, {pipeline_mode = #tpu.pipeline_mode<synchronous>, transform_indices = @transform_4, window_bounds = array<i64: 1, 128>}, {transform_indices = @transform_5, window_bounds = array<i64: 1, 8, 8, 128>}]} {
    %cst = arith.constant 0.000000e+00 : f32
    %0 = vector.broadcast %cst : f32 to vector<64x128xf32>
    %c0 = arith.constant 0 : index
    %c0_0 = arith.constant 0 : index
    %c0_1 = arith.constant 0 : index
    %c0_2 = arith.constant 0 : index
    %1 = vector.load %arg1[%c0, %c0_0, %c0_1, %c0_2] : memref<1x8x8x16xf32, #tpu.memory_space<vmem>>, vector<1x8x8x16xf32>
    %2 = vector.shape_cast %1 : vector<1x8x8x16xf32> to vector<8x8x16xf32>
    %3 = vector.shape_cast %2 : vector<8x8x16xf32> to vector<64x16xf32>
    %c0_3 = arith.constant 0 : index
    %c0_4 = arith.constant 0 : index
    %c0_5 = arith.constant 0 : index
    %4 = vector.load %arg3[%c0_3, %c0_4, %c0_5] : memref<1x16x128xf32, #tpu.memory_space<vmem>>, vector<1x16x128xf32>
    %5 = vector.shape_cast %4 : vector<1x16x128xf32> to vector<16x128xf32>
    %cst_6 = arith.constant dense<0.000000e+00> : vector<64x128xf32>
    %6 = tpu.matmul %3, %5, %cst_6 {dimension_numbers = #tpu.dot_dimension_numbers<[1], [0], [0], [1], [0, 0, 1, 1], [], []>} : vector<64x16xf32>, vector<16x128xf32>, vector<64x128xf32> -> vector<64x128xf32>
    %7 = arith.addf %0, %6 : vector<64x128xf32>
    %c0_7 = arith.constant 0 : index
    %c0_8 = arith.constant 0 : index
    %c0_9 = arith.constant 0 : index
    %c0_10 = arith.constant 0 : index
    %8 = vector.load %arg2[%c0_7, %c0_8, %c0_9, %c0_10] : memref<1x9x9x16xf32, #tpu.memory_space<vmem>>, vector<1x8x8x16xf32>
    %9 = vector.shape_cast %8 : vector<1x8x8x16xf32> to vector<8x8x16xf32>
    %10 = vector.shape_cast %9 : vector<8x8x16xf32> to vector<64x16xf32>
    %c0_11 = arith.constant 0 : index
    %c0_12 = arith.constant 0 : index
    %c0_13 = arith.constant 0 : index
    %11 = vector.load %arg4[%c0_11, %c0_12, %c0_13] : memref<4x16x128xf32, #tpu.memory_space<vmem>>, vector<1x16x128xf32>
    %12 = vector.shape_cast %11 : vector<1x16x128xf32> to vector<16x128xf32>
    %cst_14 = arith.constant dense<0.000000e+00> : vector<64x128xf32>
    %13 = tpu.matmul %10, %12, %cst_14 {dimension_numbers = #tpu.dot_dimension_numbers<[1], [0], [0], [1], [0, 0, 1, 1], [], []>} : vector<64x16xf32>, vector<16x128xf32>, vector<64x128xf32> -> vector<64x128xf32>
    %14 = arith.addf %7, %13 : vector<64x128xf32>
    %c0_15 = arith.constant 0 : index
    %c0_16 = arith.constant 0 : index
    %c1 = arith.constant 1 : index
    %c0_17 = arith.constant 0 : index
    %15 = vector.load %arg2[%c0_15, %c0_16, %c1, %c0_17] : memref<1x9x9x16xf32, #tpu.memory_space<vmem>>, vector<1x8x8x16xf32>
    %16 = vector.shape_cast %15 : vector<1x8x8x16xf32> to vector<8x8x16xf32>
    %17 = vector.shape_cast %16 : vector<8x8x16xf32> to vector<64x16xf32>
    %c1_18 = arith.constant 1 : index
    %c0_19 = arith.constant 0 : index
    %c0_20 = arith.constant 0 : index
    %18 = vector.load %arg4[%c1_18, %c0_19, %c0_20] : memref<4x16x128xf32, #tpu.memory_space<vmem>>, vector<1x16x128xf32>
    %19 = vector.shape_cast %18 : vector<1x16x128xf32> to vector<16x128xf32>
    %cst_21 = arith.constant dense<0.000000e+00> : vector<64x128xf32>
    %20 = tpu.matmul %17, %19, %cst_21 {dimension_numbers = #tpu.dot_dimension_numbers<[1], [0], [0], [1], [0, 0, 1, 1], [], []>} : vector<64x16xf32>, vector<16x128xf32>, vector<64x128xf32> -> vector<64x128xf32>
    %21 = arith.addf %14, %20 : vector<64x128xf32>
    %c0_22 = arith.constant 0 : index
    %c1_23 = arith.constant 1 : index
    %c0_24 = arith.constant 0 : index
    %c0_25 = arith.constant 0 : index
    %22 = vector.load %arg2[%c0_22, %c1_23, %c0_24, %c0_25] : memref<1x9x9x16xf32, #tpu.memory_space<vmem>>, vector<1x8x8x16xf32>
    %23 = vector.shape_cast %22 : vector<1x8x8x16xf32> to vector<8x8x16xf32>
    %24 = vector.shape_cast %23 : vector<8x8x16xf32> to vector<64x16xf32>
    %c2 = arith.constant 2 : index
    %c0_26 = arith.constant 0 : index
    %c0_27 = arith.constant 0 : index
    %25 = vector.load %arg4[%c2, %c0_26, %c0_27] : memref<4x16x128xf32, #tpu.memory_space<vmem>>, vector<1x16x128xf32>
    %26 = vector.shape_cast %25 : vector<1x16x128xf32> to vector<16x128xf32>
    %cst_28 = arith.constant dense<0.000000e+00> : vector<64x128xf32>
    %27 = tpu.matmul %24, %26, %cst_28 {dimension_numbers = #tpu.dot_dimension_numbers<[1], [0], [0], [1], [0, 0, 1, 1], [], []>} : vector<64x16xf32>, vector<16x128xf32>, vector<64x128xf32> -> vector<64x128xf32>
    %28 = arith.addf %21, %27 : vector<64x128xf32>
    %c0_29 = arith.constant 0 : index
    %c1_30 = arith.constant 1 : index
    %c1_31 = arith.constant 1 : index
    %c0_32 = arith.constant 0 : index
    %29 = vector.load %arg2[%c0_29, %c1_30, %c1_31, %c0_32] : memref<1x9x9x16xf32, #tpu.memory_space<vmem>>, vector<1x8x8x16xf32>
    %30 = vector.shape_cast %29 : vector<1x8x8x16xf32> to vector<8x8x16xf32>
    %31 = vector.shape_cast %30 : vector<8x8x16xf32> to vector<64x16xf32>
    %c3 = arith.constant 3 : index
    %c0_33 = arith.constant 0 : index
    %c0_34 = arith.constant 0 : index
    %32 = vector.load %arg4[%c3, %c0_33, %c0_34] : memref<4x16x128xf32, #tpu.memory_space<vmem>>, vector<1x16x128xf32>
    %33 = vector.shape_cast %32 : vector<1x16x128xf32> to vector<16x128xf32>
    %cst_35 = arith.constant dense<0.000000e+00> : vector<64x128xf32>
    %34 = tpu.matmul %31, %33, %cst_35 {dimension_numbers = #tpu.dot_dimension_numbers<[1], [0], [0], [1], [0, 0, 1, 1], [], []>} : vector<64x16xf32>, vector<16x128xf32>, vector<64x128xf32> -> vector<64x128xf32>
    %35 = arith.addf %28, %34 : vector<64x128xf32>
    %c0_36 = arith.constant 0 : index
    %c0_37 = arith.constant 0 : index
    %36 = vector.load %arg5[%c0_36, %c0_37] : memref<1x128xf32, #tpu.memory_space<vmem>>, vector<1x128xf32>
    %37 = vector.broadcast %36 : vector<1x128xf32> to vector<64x128xf32>
    %38 = arith.addf %35, %37 : vector<64x128xf32>
    %39 = vector.shape_cast %38 : vector<64x128xf32> to vector<8x8x128xf32>
    %c0_38 = arith.constant 0 : index
    %c0_39 = arith.constant 0 : index
    %c0_40 = arith.constant 0 : index
    %c0_41 = arith.constant 0 : index
    %40 = vector.load %arg6[%c0_38, %c0_39, %c0_40, %c0_41] : memref<1x8x8x128xf32, #tpu.memory_space<vmem>>, vector<1x8x8x128xf32>
    %41 = vector.shape_cast %40 : vector<1x8x8x128xf32> to vector<8x8x128xf32>
    %42 = vector.shape_cast %39 : vector<8x8x128xf32> to vector<1x8x8x128xf32>
    tpu.vector_store %arg6[%c0_38, %c0_39, %c0_40, %c0_41], %42 {strides = array<i32>} : memref<1x8x8x128xf32, #tpu.memory_space<vmem>>, vector<1x8x8x128xf32>,
    return
  }
  func.func @transform_0(%arg0: i32) -> (i32, i32, i32, i32) {
    %c0_i32 = arith.constant 0 : i32
    %c0_i32_0 = arith.constant 0 : i32
    %c0_i32_1 = arith.constant 0 : i32
    %c0_i32_2 = arith.constant 0 : i32
    return %arg0, %c0_i32, %c0_i32_0, %c0_i32_1 : i32, i32, i32, i32
  }
  func.func @transform_1(%arg0: i32) -> (i32, i32, i32, i32) {
    %c0_i32 = arith.constant 0 : i32
    %c0_i32_0 = arith.constant 0 : i32
    %c0_i32_1 = arith.constant 0 : i32
    %c0_i32_2 = arith.constant 0 : i32
    return %arg0, %c0_i32, %c0_i32_0, %c0_i32_1 : i32, i32, i32, i32
  }
  func.func @transform_2(%arg0: i32) -> (i32, i32, i32) {
    %c0_i32 = arith.constant 0 : i32
    %c0_i32_0 = arith.constant 0 : i32
    %c0_i32_1 = arith.constant 0 : i32
    %c0_i32_2 = arith.constant 0 : i32
    return %c0_i32, %c0_i32_0, %c0_i32_1 : i32, i32, i32
  }
  func.func @transform_3(%arg0: i32) -> (i32, i32, i32) {
    %c0_i32 = arith.constant 0 : i32
    %c0_i32_0 = arith.constant 0 : i32
    %c0_i32_1 = arith.constant 0 : i32
    %c0_i32_2 = arith.constant 0 : i32
    return %c0_i32, %c0_i32_0, %c0_i32_1 : i32, i32, i32
  }
  func.func @transform_4(%arg0: i32) -> (i32, i32) {
    %c0_i32 = arith.constant 0 : i32
    %c0_i32_0 = arith.constant 0 : i32
    %c0_i32_1 = arith.constant 0 : i32
    return %c0_i32, %c0_i32_0 : i32, i32
  }
  func.func @transform_5(%arg0: i32) -> (i32, i32, i32, i32) {
    %c0_i32 = arith.constant 0 : i32
    %c0_i32_0 = arith.constant 0 : i32
    %c0_i32_1 = arith.constant 0 : i32
    %c0_i32_2 = arith.constant 0 : i32
    return %arg0, %c0_i32, %c0_i32_0, %c0_i32_1 : i32, i32, i32, i32
  }
}

</mosaic_0001>

<llo_original>
// kernel: cross_embed_forward.1
$region0: #{cross_embed_forward.1}
  #allocation0 [shape = 'u32[]', space=smem, size = 0x4, offset = 0x4, fixed_abs, tag = 'smem constant byte address 0x4 - core index']
  #allocation1 [shape = 'u32[72,128]{1,0:T(1,128)}', space=vmem, size = 0x9000, scoped, tag = 'internal scratch']
  %s0 = inlined_call_operand.vmem [shape: f32[2,8,8,16], index: 0, kind: input, shape index: {}]
  %s1 = inlined_call_operand.vmem [shape: f32[2,9,9,16], index: 1, kind: input, shape index: {}]
  %s2 = inlined_call_operand.vmem [shape: f32[1,16,128], index: 2, kind: input, shape index: {}]
  %s3 = inlined_call_operand.vmem [shape: f32[4,16,128], index: 3, kind: input, shape index: {}]
  %s4 = inlined_call_operand.vmem [shape: f32[1,128], index: 4, kind: input, shape index: {}]
  %s5 = inlined_call_operand.hbm [shape: f32[2,8,8,128], index: 5, kind: output, shape index: {}]
  %s6 = sld [smem:[#allocation0]]
  $region53: #{cross_embed_forward.1} parent=0
    _
  %s8 = ssub.s32 1, %s6
  %s9 = scalar_select 0, %s8, %s6
  $region1: #{cross_embed_forward.1} parent=0
    #allocation2 [shape = 'u8[65536]{0}', space=vmem, size = 0x10000, scoped, tag = 'output window, operand 0']
    #allocation3 [shape = 's32[2]{0}', space=sflag, size = 0x8, scoped, tag = 'scoped memory for cross_embed_forward.1']
    %10 = vsyncpa [#allocation3], 0
    %s11 = scalar_lea.sflag [#allocation3], 1
    %12 = vsyncpa %s11, 0
    loop: start=0, step=1, limit=4
    $region2: #{cross_embed_forward.1} parent=1 // loop_pre_header
      _
    $region3: #{cross_embed_forward.1} parent=1 // loop_header
      %s14 = sphi 0, %s18
      %p15 = scmp.ge.s32.totalorder %s14, 4
      %s24 = sphi 0, %s26
      %s27 = sphi 0, %s24
      %s28 = sphi 0, %s27
      %s44 = sphi 0, %s28
      %s50 = sphi 0, %s52
      %s53 = sphi 0, %s50
      %s54 = sphi 0, %s53
      %s70 = sphi 0, %s54
      %s74 = sphi 0, %s74
      %s76 = sphi 0, %s74
      %s77 = sphi 0, %s76
      %s91 = sphi 0, %s77
      %s95 = sphi 0, %s95
      %s97 = sphi 0, %s95
      %s98 = sphi 0, %s97
      %s112 = sphi 0, %s98
      %s116 = sphi 0, %s116
      %s118 = sphi 0, %s116
      %s119 = sphi 0, %s118
      %s133 = sphi 0, %s119
      %s139 = sphi 0, %s141
      %s142 = sphi 0, %s139
      %s143 = sphi 0, %s142
      %s159 = sphi 0, %s143
    $region4: #{cross_embed_forward.1} parent=1 // loop_header_branch
      %17 = sbr.rel (%p15) target = $region8
    $region5: #{cross_embed_forward.1} parent=1 // loop_body
      %s19 = ssub.s32 %s14, 1
      %s20 = ssub.s32 %s14, 2
      %s21 = sadd.s32 %s14, 1
      %s22 = ssub.s32 %s14, %s21
      %p23 = scmp.eq.s32.totalorder %s22, 0
      %s25 = sadd.s32 %s24, 1
      %s26 = scalar_select %p23, %s24, %s25
      %p29 = pneg %p23
      %p30 = scmp.eq.s32.totalorder %s14, 1
      %p31 = por %p29, %p30
      %p32 = scmp.ne.s32.totalorder %s24, %s27
      %p33 = scmp.eq.s32.totalorder %s14, 0
      %p34 = por %p32, %p33
      %p35 = scmp.ne.s32.totalorder %s24, %s27
      %p36 = scmp.eq.s32.totalorder %s19, 1
      %p37 = por %p35, %p36
      %p38 = scmp.ne.s32.totalorder %s27, %s28
      %p39 = scmp.eq.s32.totalorder %s19, 0
      %p40 = por %p38, %p39
      %p41 = scmp.ne.s32.totalorder %s27, %s28
      %p42 = scmp.eq.s32.totalorder %s20, 1
      %p43 = por %p41, %p42
      %p45 = scmp.ne.s32.totalorder %s28, %s44
      %p46 = scmp.eq.s32.totalorder %s20, 0
      %p47 = por %p45, %p46
      %s48 = ssub.s32 %s14, %s21
      %p49 = scmp.eq.s32.totalorder %s48, 0
      %s51 = sadd.s32 %s50, 1
      %s52 = scalar_select %p49, %s50, %s51
      %p55 = pneg %p49
      %p56 = scmp.eq.s32.totalorder %s14, 1
      %p57 = por %p55, %p56
      %p58 = scmp.ne.s32.totalorder %s50, %s53
      %p59 = scmp.eq.s32.totalorder %s14, 0
      %p60 = por %p58, %p59
      %p61 = scmp.ne.s32.totalorder %s50, %s53
      %p62 = scmp.eq.s32.totalorder %s19, 1
      %p63 = por %p61, %p62
      %p64 = scmp.ne.s32.totalorder %s53, %s54
      %p65 = scmp.eq.s32.totalorder %s19, 0
      %p66 = por %p64, %p65
      %p67 = scmp.ne.s32.totalorder %s53, %s54
      %p68 = scmp.eq.s32.totalorder %s20, 1
      %p69 = por %p67, %p68
      %p71 = scmp.ne.s32.totalorder %s54, %s70
      %p72 = scmp.eq.s32.totalorder %s20, 0
      %p73 = por %p71, %p72
      %s75 = sadd.s32 %s74, 1
      %p78 = scmp.eq.s32.totalorder %s14, 1
      %p79 = scmp.ne.s32.totalorder %s74, %s76
      %p80 = scmp.eq.s32.totalorder %s14, 0
      %p81 = por %p79, %p80
      %p82 = scmp.ne.s32.totalorder %s74, %s76
      %p83 = scmp.eq.s32.totalorder %s19, 1
      %p84 = por %p82, %p83
      %p85 = scmp.ne.s32.totalorder %s76, %s77
      %p86 = scmp.eq.s32.totalorder %s19, 0
      %p87 = por %p85, %p86
      %p88 = scmp.ne.s32.totalorder %s76, %s77
      %p89 = scmp.eq.s32.totalorder %s20, 1
      %p90 = por %p88, %p89
      %p92 = scmp.ne.s32.totalorder %s77, %s91
      %p93 = scmp.eq.s32.totalorder %s20, 0
      %p94 = por %p92, %p93
      %s96 = sadd.s32 %s95, 1
      %p99 = scmp.eq.s32.totalorder %s14, 1
      %p100 = scmp.ne.s32.totalorder %s95, %s97
      %p101 = scmp.eq.s32.totalorder %s14, 0
      %p102 = por %p100, %p101
      %p103 = scmp.ne.s32.totalorder %s95, %s97
      %p104 = scmp.eq.s32.totalorder %s19, 1
      %p105 = por %p103, %p104
      %p106 = scmp.ne.s32.totalorder %s97, %s98
      %p107 = scmp.eq.s32.totalorder %s19, 0
      %p108 = por %p106, %p107
      %p109 = scmp.ne.s32.totalorder %s97, %s98
      %p110 = scmp.eq.s32.totalorder %s20, 1
      %p111 = por %p109, %p110
      %p113 = scmp.ne.s32.totalorder %s98, %s112
      %p114 = scmp.eq.s32.totalorder %s20, 0
      %p115 = por %p113, %p114
      %s117 = sadd.s32 %s116, 1
      %p120 = scmp.eq.s32.totalorder %s14, 1
      %p121 = scmp.ne.s32.totalorder %s116, %s118
      %p122 = scmp.eq.s32.totalorder %s14, 0
      %p123 = por %p121, %p122
      %p124 = scmp.ne.s32.totalorder %s116, %s118
      %p125 = scmp.eq.s32.totalorder %s19, 1
      %p126 = por %p124, %p125
      %p127 = scmp.ne.s32.totalorder %s118, %s119
      %p128 = scmp.eq.s32.totalorder %s19, 0
      %p129 = por %p127, %p128
      %p130 = scmp.ne.s32.totalorder %s118, %s119
      %p131 = scmp.eq.s32.totalorder %s20, 1
      %p132 = por %p130, %p131
      %p134 = scmp.ne.s32.totalorder %s119, %s133
      %p135 = scmp.eq.s32.totalorder %s20, 0
      %p136 = por %p134, %p135
      %s137 = ssub.s32 %s14, %s21
      %p138 = scmp.eq.s32.totalorder %s137, 0
      %s140 = sadd.s32 %s139, 1
      %s141 = scalar_select %p138, %s139, %s140
      %p144 = pneg %p138
      %p145 = scmp.eq.s32.totalorder %s14, 1
      %p146 = por %p144, %p145
      %p147 = scmp.ne.s32.totalorder %s139, %s142
      %p148 = scmp.eq.s32.totalorder %s14, 0
      %p149 = por %p147, %p148
      %p150 = scmp.ne.s32.totalorder %s139, %s142
      %p151 = scmp.eq.s32.totalorder %s19, 1
      %p152 = por %p150, %p151
      %p153 = scmp.ne.s32.totalorder %s142, %s143
      %p154 = scmp.eq.s32.totalorder %s19, 0
      %p155 = por %p153, %p154
      %p156 = scmp.ne.s32.totalorder %s142, %s143
      %p157 = scmp.eq.s32.totalorder %s20, 1
      %p158 = por %p156, %p157
      %p160 = scmp.ne.s32.totalorder %s143, %s159
      %p161 = scmp.eq.s32.totalorder %s20, 0
      %p162 = por %p160, %p161
      %p163 = scmp.le.s32.totalorder 1, %s14
      %p164 = scmp.lt.s32.totalorder %s14, 3
      %p165 = pnand %p163, %p164
      %p166 = pneg %p165
      // Predicated region
      $region9: #{cross_embed_forward.1} parent=5 // pred_check
        _
      $region10: #{cross_embed_forward.1} parent=5 // pred_check_branch
        %168 = sbr.rel (%p165) target = $region12
      $region11: #{cross_embed_forward.1} parent=5 // pred_region
        %s169 = ssub.s32 %s14, 1
        // Predicated region
        $region13: #{cross_embed_forward.1} parent=11 // pred_check
          %p170 = pneg %p87
        $region14: #{cross_embed_forward.1} parent=11 // pred_check_branch
          %172 = sbr.rel (%p170) target = $region16
        $region15: #{cross_embed_forward.1} parent=11 // pred_region
          _
        $region16: #{cross_embed_forward.1} parent=11 // pred_fallthru
          _
        // Predicated region
        $region17: #{cross_embed_forward.1} parent=11 // pred_check
          %p173 = pneg %p108
        $region18: #{cross_embed_forward.1} parent=11 // pred_check_branch
          %175 = sbr.rel (%p173) target = $region20
        $region19: #{cross_embed_forward.1} parent=11 // pred_region
          _
        $region20: #{cross_embed_forward.1} parent=11 // pred_fallthru
          _
        // Predicated region
        $region21: #{cross_embed_forward.1} parent=11 // pred_check
          %p176 = pneg %p129
        $region22: #{cross_embed_forward.1} parent=11 // pred_check_branch
          %178 = sbr.rel (%p176) target = $region24
        $region23: #{cross_embed_forward.1} parent=11 // pred_region
          _
        $region24: #{cross_embed_forward.1} parent=11 // pred_fallthru
          _
      $region12: #{cross_embed_forward.1} parent=5 // pred_fallthru
        _
      %p179 = scmp.lt.s32.totalorder %s14, 2
      // Predicated region
      $region25: #{cross_embed_forward.1} parent=5 // pred_check
        %p180 = pneg %p179
      $region26: #{cross_embed_forward.1} parent=5 // pred_check_branch
        %182 = sbr.rel (%p180) target = $region28
      $region27: #{cross_embed_forward.1} parent=5 // pred_region
        // Predicated region
        $region29: #{cross_embed_forward.1} parent=27 // pred_check
          %p183 = pneg %p34
        $region30: #{cross_embed_forward.1} parent=27 // pred_check_branch
          %185 = sbr.rel (%p183) target = $region32
        $region31: #{cross_embed_forward.1} parent=27 // pred_region
          %p186 = scmp.lt.s32.totalorder %s14, 1
          %s187 = scalar_select %p186, %s14, 1
          %s188 = smul.addr %s187, 8
          %s189 = smul.addr %s188, 8
          %s190 = scalar_lea.vmem %s0, %s189
        $region32: #{cross_embed_forward.1} parent=27 // pred_fallthru
          _
        // Predicated region
        $region33: #{cross_embed_forward.1} parent=27 // pred_check
          %p191 = pneg %p60
        $region34: #{cross_embed_forward.1} parent=27 // pred_check_branch
          %193 = sbr.rel (%p191) target = $region36
        $region35: #{cross_embed_forward.1} parent=27 // pred_region
          %p194 = scmp.lt.s32.totalorder %s14, 1
          %s195 = scalar_select %p194, %s14, 1
          %s196 = smul.addr %s195, 18
          %s197 = smul.addr %s196, 8
          %s198 = scalar_lea.vmem %s1, %s197
        $region36: #{cross_embed_forward.1} parent=27 // pred_fallthru
          _
      $region28: #{cross_embed_forward.1} parent=5 // pred_fallthru
        _
      %p199 = scmp.le.s32.totalorder 1, %s14
      %p200 = scmp.lt.s32.totalorder %s14, 3
      %p201 = pnand %p199, %p200
      %p202 = pneg %p201
      // Predicated region
      $region37: #{cross_embed_forward.1} parent=5 // pred_check
        _
      $region38: #{cross_embed_forward.1} parent=5 // pred_check_branch
        %204 = sbr.rel (%p201) target = $region40
      $region39: #{cross_embed_forward.1} parent=5 // pred_region
        %s205 = ssub.s32 %s14, 1
        %p206 = scmp.lt.s32.totalorder %s19, 1
        %s207 = scalar_select %p206, %s19, 1
        %s208 = smul.addr %s207, 8
        %s209 = smul.addr %s208, 8
        %s210 = scalar_lea.vmem %s0, %s209
        %p211 = pneg %p40
        %p212 = pneg %p37
        %p213 = scmp.lt.s32.totalorder %s19, 1
        %s214 = scalar_select %p213, %s19, 1
        %s215 = smul.addr %s214, 18
        %s216 = smul.addr %s215, 8
        %s217 = scalar_lea.vmem %s1, %s216
        %p218 = pneg %p66
        %p219 = pneg %p63
        %p220 = pneg %p87
        %p221 = pneg %p84
        %p222 = pneg %p108
        %p223 = pneg %p105
        %p224 = pneg %p129
        %p225 = pneg %p126
        %p226 = pneg %p155
        %p227 = pneg %p152
        %s228 = sand.u32 %s142, 1
        %s229 = scalar_lea.sflag [#allocation3], %s228
        %s230 = sand.u32 %s142, 1
        %s231 = smul.addr %s230, 64
        %s232 = scalar_lea.vmem [#allocation2], %s231
        %p233 = scmp.lt.s32.totalorder %s19, 1
        %s234 = scalar_select %p233, %s19, 1
        %s235 = smul.addr %s234, 8
        %s236 = smul.addr %s235, 8
        %s237 = scalar_lea.vmem %s0, %s236
        %p238 = scmp.lt.s32.totalorder %s19, 1
        %s239 = scalar_select %p238, %s19, 1
        %s240 = smul.addr %s239, 18
        %s241 = smul.addr %s240, 8
        %s242 = scalar_lea.vmem %s1, %s241
        %v243 = vld [vmem:[%s237] sm:$0xff]
        %v244 = vld [vmem:[%s237 + $0x8] sm:$0xff]
        %v245 = vld [vmem:[%s237 + $0x10] sm:$0xff]
        %v246 = vld [vmem:[%s237 + $0x18] sm:$0xff]
        %v247 = vld [vmem:[%s237 + $0x20] sm:$0xff]
        %v248 = vld [vmem:[%s237 + $0x28] sm:$0xff]
        %v249 = vld [vmem:[%s237 + $0x30] sm:$0xff]
        %v250 = vld [vmem:[%s237 + $0x38] sm:$0xff]
        %v251 = vld [vmem:[%s2] sm:$0xff]
        %v252 = vld [vmem:[%s2 + $0x8] sm:$0xff]
        %v253 = vld [vmem:[%s242] sm:$0xff]
        %v254 = vld [vmem:[%s242 + $0x10] sm:$0xff]
        %v255 = vld [vmem:[%s242 + $0x20] sm:$0xff]
        %v256 = vld [vmem:[%s242 + $0x30] sm:$0xff]
        %v257 = vld [vmem:[%s242 + $0x40] sm:$0xff]
        %v258 = vld [vmem:[%s242 + $0x50] sm:$0xff]
        %v259 = vld [vmem:[%s242 + $0x60] sm:$0xff]
        %v260 = vld [vmem:[%s242 + $0x70] sm:$0xff]
        %v261 = vld [vmem:[%s3] sm:$0xff]
        %v262 = vld [vmem:[%s3 + $0x8] sm:$0xff]
        %vm263 = vcmask 130048
        %v265 = vsel %vm263, %v253, 0
        %v268 = vsel %vm263, %v254, 0
        %v271 = vsel %vm263, %v255, 0
        %v274 = vsel %vm263, %v256, 0
        %v277 = vsel %vm263, %v257, 0
        %v280 = vsel %vm263, %v258, 0
        %v283 = vsel %vm263, %v259, 0
        %v286 = vsel %vm263, %v260, 0
        %288 = vmatpush.msra.mxu0 0.0
        %289 = vmatpush.msra.mxu0 0.0
        %290 = vmatpush.msra.mxu0 0.0
        %291 = vmatpush.msra.mxu0 0.0
        %292 = vmatpush.msra.mxu0 0.0
        %293 = vmatpush.msra.mxu0 0.0
        %294 = vmatpush.msra.mxu0 0.0
        %295 = vmatpush.msra.mxu0 0.0
        %296 = vmatpush.msra.mxu0 0.0
        %297 = vmatpush.msra.mxu0 0.0
        %298 = vmatpush.msra.mxu0 0.0
        %299 = vmatpush.msra.mxu0 0.0
        %300 = vmatpush.msra.mxu0 0.0
        %301 = vmatpush.msra.mxu0 0.0
        %302 = vmatpush.msra.mxu0 %v262
        %303 = vmatpush.msra.mxu0 %v261
        %304 = vmatmul.f32.gmra.mxu0 %v265
        %v305 = vpop.f32.mrf.mxu0
        %v306 = vadd.f32 0.0, %v305
        %307 = vmatmul.f32.gmra.mxu0 %v268
        %v308 = vpop.f32.mrf.mxu0
        %v309 = vadd.f32 0.0, %v308
        %310 = vmatmul.f32.gmra.mxu0 %v271
        %v311 = vpop.f32.mrf.mxu0
        %v312 = vadd.f32 0.0, %v311
        %313 = vmatmul.f32.gmra.mxu0 %v274
        %v314 = vpop.f32.mrf.mxu0
        %v315 = vadd.f32 0.0, %v314
        %316 = vmatmul.f32.gmra.mxu0 %v277
        %v317 = vpop.f32.mrf.mxu0
        %v318 = vadd.f32 0.0, %v317
        %319 = vmatmul.f32.gmra.mxu0 %v280
        %v320 = vpop.f32.mrf.mxu0
        %v321 = vadd.f32 0.0, %v320
        %322 = vmatmul.f32.gmra.mxu0 %v283
        %v323 = vpop.f32.mrf.mxu0
        %v324 = vadd.f32 0.0, %v323
        %325 = vmatmul.f32.gmra.mxu0 %v286
        %v326 = vpop.f32.mrf.mxu0
        %v327 = vadd.f32 0.0, %v326
        %328 = vdwg.mxu0
        %v330 = vsel %vm263, %v243, 0
        %v333 = vsel %vm263, %v244, 0
        %v336 = vsel %vm263, %v245, 0
        %v339 = vsel %vm263, %v246, 0
        %v342 = vsel %vm263, %v247, 0
        %v345 = vsel %vm263, %v248, 0
        %v348 = vsel %vm263, %v249, 0
        %v351 = vsel %vm263, %v250, 0
        %353 = vmatpush.msra.mxu0 0.0
        %354 = vmatpush.msra.mxu0 0.0
        %355 = vmatpush.msra.mxu0 0.0
        %356 = vmatpush.msra.mxu0 0.0
        %357 = vmatpush.msra.mxu0 0.0
        %358 = vmatpush.msra.mxu0 0.0
        %359 = vmatpush.msra.mxu0 0.0
        %360 = vmatpush.msra.mxu0 0.0
        %361 = vmatpush.msra.mxu0 0.0
        %362 = vmatpush.msra.mxu0 0.0
        %363 = vmatpush.msra.mxu0 0.0
        %364 = vmatpush.msra.mxu0 0.0
        %365 = vmatpush.msra.mxu0 0.0
        %366 = vmatpush.msra.mxu0 0.0
        %367 = vmatpush.msra.mxu0 %v252
        %368 = vmatpush.msra.mxu0 %v251
        %369 = vmatmul.f32.gmra.mxu0 %v330
        %v370 = vpop.f32.mrf.mxu0
        %v371 = vadd.f32 %v306, %v370
        %372 = vmatmul.f32.gmra.mxu0 %v333
        %v373 = vpop.f32.mrf.mxu0
        %v374 = vadd.f32 %v309, %v373
        %375 = vmatmul.f32.gmra.mxu0 %v336
        %v376 = vpop.f32.mrf.mxu0
        %v377 = vadd.f32 %v312, %v376
        %378 = vmatmul.f32.gmra.mxu0 %v339
        %v379 = vpop.f32.mrf.mxu0
        %v380 = vadd.f32 %v315, %v379
        %381 = vmatmul.f32.gmra.mxu0 %v342
        %v382 = vpop.f32.mrf.mxu0
        %v383 = vadd.f32 %v318, %v382
        %384 = vmatmul.f32.gmra.mxu0 %v345
        %v385 = vpop.f32.mrf.mxu0
        %v386 = vadd.f32 %v321, %v385
        %387 = vmatmul.f32.gmra.mxu0 %v348
        %v388 = vpop.f32.mrf.mxu0
        %v389 = vadd.f32 %v324, %v388
        %390 = vmatmul.f32.gmra.mxu0 %v351
        %v391 = vpop.f32.mrf.mxu0
        %v392 = vadd.f32 %v327, %v391
        %393 = vdwg.mxu0
        %v394 = vld [vmem:[%s242 + $0x1] sm:$0xff]
        %v395 = vld [vmem:[%s242 + $0x11] sm:$0xff]
        %v396 = vld [vmem:[%s242 + $0x21] sm:$0xff]
        %v397 = vld [vmem:[%s242 + $0x31] sm:$0xff]
        %v398 = vld [vmem:[%s242 + $0x41] sm:$0xff]
        %v399 = vld [vmem:[%s242 + $0x51] sm:$0xff]
        %v400 = vld [vmem:[%s242 + $0x61] sm:$0xff]
        %v401 = vld [vmem:[%s242 + $0x71] sm:$0xff]
        %s402 = scalar_lea.vmem %s3, 16
        %v403 = vld [vmem:[%s402] sm:$0xff]
        %v404 = vld [vmem:[%s402 + $0x8] sm:$0xff]
        %v406 = vsel %vm263, %v394, 0
        %v409 = vsel %vm263, %v395, 0
        %v412 = vsel %vm263, %v396, 0
        %v415 = vsel %vm263, %v397, 0
        %v418 = vsel %vm263, %v398, 0
        %v421 = vsel %vm263, %v399, 0
        %v424 = vsel %vm263, %v400, 0
        %v427 = vsel %vm263, %v401, 0
        %429 = vmatpush.msra.mxu0 0.0
        %430 = vmatpush.msra.mxu0 0.0
        %431 = vmatpush.msra.mxu0 0.0
        %432 = vmatpush.msra.mxu0 0.0
        %433 = vmatpush.msra.mxu0 0.0
        %434 = vmatpush.msra.mxu0 0.0
        %435 = vmatpush.msra.mxu0 0.0
        %436 = vmatpush.msra.mxu0 0.0
        %437 = vmatpush.msra.mxu0 0.0
        %438 = vmatpush.msra.mxu0 0.0
        %439 = vmatpush.msra.mxu0 0.0
        %440 = vmatpush.msra.mxu0 0.0
        %441 = vmatpush.msra.mxu0 0.0
        %442 = vmatpush.msra.mxu0 0.0
        %443 = vmatpush.msra.mxu0 %v404
        %444 = vmatpush.msra.mxu0 %v403
        %445 = vmatmul.f32.gmra.mxu0 %v406
        %v446 = vpop.f32.mrf.mxu0
        %v447 = vadd.f32 0.0, %v446
        %448 = vmatmul.f32.gmra.mxu0 %v409
        %v449 = vpop.f32.mrf.mxu0
        %v450 = vadd.f32 0.0, %v449
        %451 = vmatmul.f32.gmra.mxu0 %v412
        %v452 = vpop.f32.mrf.mxu0
        %v453 = vadd.f32 0.0, %v452
        %454 = vmatmul.f32.gmra.mxu0 %v415
        %v455 = vpop.f32.mrf.mxu0
        %v456 = vadd.f32 0.0, %v455
        %457 = vmatmul.f32.gmra.mxu0 %v418
        %v458 = vpop.f32.mrf.mxu0
        %v459 = vadd.f32 0.0, %v458
        %460 = vmatmul.f32.gmra.mxu0 %v421
        %v461 = vpop.f32.mrf.mxu0
        %v462 = vadd.f32 0.0, %v461
        %463 = vmatmul.f32.gmra.mxu0 %v424
        %v464 = vpop.f32.mrf.mxu0
        %v465 = vadd.f32 0.0, %v464
        %466 = vmatmul.f32.gmra.mxu0 %v427
        %v467 = vpop.f32.mrf.mxu0
        %v468 = vadd.f32 0.0, %v467
        %469 = vdwg.mxu0
        %v470 = vadd.f32 %v371, %v447
        %v471 = vadd.f32 %v374, %v450
        %v472 = vadd.f32 %v377, %v453
        %v473 = vadd.f32 %v380, %v456
        %v474 = vadd.f32 %v383, %v459
        %v475 = vadd.f32 %v386, %v462
        %v476 = vadd.f32 %v389, %v465
        %v477 = vadd.f32 %v392, %v468
        %s478 = scalar_lea.vmem %s242, 16
        %v479 = vld [vmem:[%s478] sm:$0xff]
        %v480 = vld [vmem:[%s478 + $0x10] sm:$0xff]
        %v481 = vld [vmem:[%s478 + $0x20] sm:$0xff]
        %v482 = vld [vmem:[%s478 + $0x30] sm:$0xff]
        %v483 = vld [vmem:[%s478 + $0x40] sm:$0xff]
        %v484 = vld [vmem:[%s478 + $0x50] sm:$0xff]
        %v485 = vld [vmem:[%s478 + $0x60] sm:$0xff]
        %v486 = vld [vmem:[%s478 + $0x70] sm:$0xff]
        %s487 = scalar_lea.vmem %s3, 32
        %v488 = vld [vmem:[%s487] sm:$0xff]
        %v489 = vld [vmem:[%s487 + $0x8] sm:$0xff]
        %v491 = vsel %vm263, %v479, 0
        %v494 = vsel %vm263, %v480, 0
        %v497 = vsel %vm263, %v481, 0
        %v500 = vsel %vm263, %v482, 0
        %v503 = vsel %vm263, %v483, 0
        %v506 = vsel %vm263, %v484, 0
        %v509 = vsel %vm263, %v485, 0
        %v512 = vsel %vm263, %v486, 0
        %514 = vmatpush.msra.mxu0 0.0
        %515 = vmatpush.msra.mxu0 0.0
        %516 = vmatpush.msra.mxu0 0.0
        %517 = vmatpush.msra.mxu0 0.0
        %518 = vmatpush.msra.mxu0 0.0
        %519 = vmatpush.msra.mxu0 0.0
        %520 = vmatpush.msra.mxu0 0.0
        %521 = vmatpush.msra.mxu0 0.0
        %522 = vmatpush.msra.mxu0 0.0
        %523 = vmatpush.msra.mxu0 0.0
        %524 = vmatpush.msra.mxu0 0.0
        %525 = vmatpush.msra.mxu0 0.0
        %526 = vmatpush.msra.mxu0 0.0
        %527 = vmatpush.msra.mxu0 0.0
        %528 = vmatpush.msra.mxu0 %v489
        %529 = vmatpush.msra.mxu0 %v488
        %530 = vmatmul.f32.gmra.mxu0 %v491
        %v531 = vpop.f32.mrf.mxu0
        %v532 = vadd.f32 0.0, %v531
        %533 = vmatmul.f32.gmra.mxu0 %v494
        %v534 = vpop.f32.mrf.mxu0
        %v535 = vadd.f32 0.0, %v534
        %536 = vmatmul.f32.gmra.mxu0 %v497
        %v537 = vpop.f32.mrf.mxu0
        %v538 = vadd.f32 0.0, %v537
        %539 = vmatmul.f32.gmra.mxu0 %v500
        %v540 = vpop.f32.mrf.mxu0
        %v541 = vadd.f32 0.0, %v540
        %542 = vmatmul.f32.gmra.mxu0 %v503
        %v543 = vpop.f32.mrf.mxu0
        %v544 = vadd.f32 0.0, %v543
        %545 = vmatmul.f32.gmra.mxu0 %v506
        %v546 = vpop.f32.mrf.mxu0
        %v547 = vadd.f32 0.0, %v546
        %548 = vmatmul.f32.gmra.mxu0 %v509
        %v549 = vpop.f32.mrf.mxu0
        %v550 = vadd.f32 0.0, %v549
        %551 = vmatmul.f32.gmra.mxu0 %v512
        %v552 = vpop.f32.mrf.mxu0
        %v553 = vadd.f32 0.0, %v552
        %554 = vdwg.mxu0
        %v555 = vadd.f32 %v470, %v532
        %v556 = vadd.f32 %v471, %v535
        %v557 = vadd.f32 %v472, %v538
        %v558 = vadd.f32 %v473, %v541
        %v559 = vadd.f32 %v474, %v544
        %v560 = vadd.f32 %v475, %v547
        %v561 = vadd.f32 %v476, %v550
        %v562 = vadd.f32 %v477, %v553
        %v563 = vld [vmem:[%s478 + $0x1] sm:$0xff]
        %v564 = vld [vmem:[%s478 + $0x11] sm:$0xff]
        %v565 = vld [vmem:[%s478 + $0x21] sm:$0xff]
        %v566 = vld [vmem:[%s478 + $0x31] sm:$0xff]
        %v567 = vld [vmem:[%s478 + $0x41] sm:$0xff]
        %v568 = vld [vmem:[%s478 + $0x51] sm:$0xff]
        %v569 = vld [vmem:[%s478 + $0x61] sm:$0xff]
        %v570 = vld [vmem:[%s478 + $0x71] sm:$0xff]
        %s571 = scalar_lea.vmem %s3, 48
        %v572 = vld [vmem:[%s571] sm:$0xff]
        %v573 = vld [vmem:[%s571 + $0x8] sm:$0xff]
        %v575 = vsel %vm263, %v563, 0
        %v578 = vsel %vm263, %v564, 0
        %v581 = vsel %vm263, %v565, 0
        %v584 = vsel %vm263, %v566, 0
        %v587 = vsel %vm263, %v567, 0
        %v590 = vsel %vm263, %v568, 0
        %v593 = vsel %vm263, %v569, 0
        %v596 = vsel %vm263, %v570, 0
        %598 = vmatpush.msra.mxu0 0.0
        %599 = vmatpush.msra.mxu0 0.0
        %600 = vmatpush.msra.mxu0 0.0
        %601 = vmatpush.msra.mxu0 0.0
        %602 = vmatpush.msra.mxu0 0.0
        %603 = vmatpush.msra.mxu0 0.0
        %604 = vmatpush.msra.mxu0 0.0
        %605 = vmatpush.msra.mxu0 0.0
        %606 = vmatpush.msra.mxu0 0.0
        %607 = vmatpush.msra.mxu0 0.0
        %608 = vmatpush.msra.mxu0 0.0
        %609 = vmatpush.msra.mxu0 0.0
        %610 = vmatpush.msra.mxu0 0.0
        %611 = vmatpush.msra.mxu0 0.0
        %612 = vmatpush.msra.mxu0 %v573
        %613 = vmatpush.msra.mxu0 %v572
        %614 = vmatmul.f32.gmra.mxu0 %v575
        %v615 = vpop.f32.mrf.mxu0
        %v616 = vadd.f32 0.0, %v615
        %617 = vmatmul.f32.gmra.mxu0 %v578
        %v618 = vpop.f32.mrf.mxu0
        %v619 = vadd.f32 0.0, %v618
        %620 = vmatmul.f32.gmra.mxu0 %v581
        %v621 = vpop.f32.mrf.mxu0
        %v622 = vadd.f32 0.0, %v621
        %623 = vmatmul.f32.gmra.mxu0 %v584
        %v624 = vpop.f32.mrf.mxu0
        %v625 = vadd.f32 0.0, %v624
        %626 = vmatmul.f32.gmra.mxu0 %v587
        %v627 = vpop.f32.mrf.mxu0
        %v628 = vadd.f32 0.0, %v627
        %629 = vmatmul.f32.gmra.mxu0 %v590
        %v630 = vpop.f32.mrf.mxu0
        %v631 = vadd.f32 0.0, %v630
        %632 = vmatmul.f32.gmra.mxu0 %v593
        %v633 = vpop.f32.mrf.mxu0
        %v634 = vadd.f32 0.0, %v633
        %635 = vmatmul.f32.gmra.mxu0 %v596
        %v636 = vpop.f32.mrf.mxu0
        %v637 = vadd.f32 0.0, %v636
        %638 = vdwg.mxu0
        %v639 = vadd.f32 %v555, %v616
        %v640 = vadd.f32 %v556, %v619
        %v641 = vadd.f32 %v557, %v622
        %v642 = vadd.f32 %v558, %v625
        %v643 = vadd.f32 %v559, %v628
        %v644 = vadd.f32 %v560, %v631
        %v645 = vadd.f32 %v561, %v634
        %v646 = vadd.f32 %v562, %v637
        %v647 = vld [vmem:[%s4] sm:$0x1]
        %v649 = vperm.slane %v647, 0
        %v651 = vadd.f32 %v639, %v649
        %v652 = vadd.f32 %v640, %v649
        %v653 = vadd.f32 %v641, %v649
        %v654 = vadd.f32 %v642, %v649
        %v655 = vadd.f32 %v643, %v649
        %v656 = vadd.f32 %v644, %v649
        %v657 = vadd.f32 %v645, %v649
        %v658 = vadd.f32 %v646, %v649
        %659 = vst [vmem:[%s232] sm:$0xff] %v651
        %660 = vst [vmem:[%s232 + $0x8] sm:$0xff] %v652
        %661 = vst [vmem:[%s232 + $0x10] sm:$0xff] %v653
        %662 = vst [vmem:[%s232 + $0x18] sm:$0xff] %v654
        %663 = vst [vmem:[%s232 + $0x20] sm:$0xff] %v655
        %664 = vst [vmem:[%s232 + $0x28] sm:$0xff] %v656
        %665 = vst [vmem:[%s232 + $0x30] sm:$0xff] %v657
        %666 = vst [vmem:[%s232 + $0x38] sm:$0xff] %v658
        %s667 = sand.u32 %s142, 1
        %s668 = scalar_lea.sflag [#allocation3], %s667
        %s669 = sand.u32 %s142, 1
        %s670 = smul.addr %s669, 64
        %s671 = scalar_lea.vmem [#allocation2], %s670
        // Predicated region
        $region41: #{cross_embed_forward.1} parent=39 // pred_check
          %p672 = pneg %p152
        $region42: #{cross_embed_forward.1} parent=39 // pred_check_branch
          %674 = sbr.rel (%p672) target = $region44
        $region43: #{cross_embed_forward.1} parent=39 // pred_region
          %676 = vsyncadd %s668, 0
          %s677 = smul.addr %s19, 8
          %s678 = smul.addr %s677, 8
          %s679 = scalar_lea.hbm %s5, %s678
          %s680 = sshll.u32 %s671, 4
          %s681 = int_to_ptr.vmem [resolvable:$true] %s680
          %s682 = sshll.u32 %s679, 4
          %s683 = int_to_ptr.hbm [resolvable:$true] %s682
          %688 = dma.vmem_to_hbm [thread:$0]  %s681, 1024, %s683, %s668, 128, 128, 8
        $region44: #{cross_embed_forward.1} parent=39 // pred_fallthru
          _
      $region40: #{cross_embed_forward.1} parent=5 // pred_fallthru
        _
      %p689 = scmp.le.s32.totalorder 2, %s14
      // Predicated region
      $region45: #{cross_embed_forward.1} parent=5 // pred_check
        %p690 = pneg %p689
      $region46: #{cross_embed_forward.1} parent=5 // pred_check_branch
        %692 = sbr.rel (%p690) target = $region48
      $region47: #{cross_embed_forward.1} parent=5 // pred_region
        %s693 = ssub.s32 %s14, 2
        // Predicated region
        $region49: #{cross_embed_forward.1} parent=47 // pred_check
          %p694 = pneg %p158
        $region50: #{cross_embed_forward.1} parent=47 // pred_check_branch
          %696 = sbr.rel (%p694) target = $region52
        $region51: #{cross_embed_forward.1} parent=47 // pred_region
          %s697 = sand.u32 %s143, 1
          %s698 = scalar_lea.sflag [#allocation3], %s697
          %s699 = sand.u32 %s143, 1
          %s700 = smul.addr %s699, 64
          %s701 = scalar_lea.vmem [#allocation2], %s700
          %703 = dma.done %s698, 1024
        $region52: #{cross_embed_forward.1} parent=47 // pred_fallthru
          _
      $region48: #{cross_embed_forward.1} parent=5 // pred_fallthru
        _
    $region6: #{cross_embed_forward.1} parent=1 // loop_footer
      %s18 = sadd.s32 1, %s14
    $region7: #{cross_embed_forward.1} parent=1 // loop_footer_branch
      %13 = sbr.rel target = $region3
    $region8: #{cross_embed_forward.1} parent=1 // loop_exit
      _
    %704 = vsyncpa [#allocation3], 1
    %s705 = scalar_lea.sflag [#allocation3], 1
    %706 = vsyncpa %s705, 1

</llo_original>
